<compile_context>
chip_gen: v7x
topology: tpu7x:2x2x1
jax: 0.10.0
libtpu: 0.0.40
codegen_flags: <defaults>
</compile_context>

<pallas_src>
import math

import jax
import jax.numpy as jnp
from jax.experimental import pallas as pl
from jax.experimental.pallas import tpu as pltpu


def _row_chunks(n_rows, row_bytes, itemsize, *, target_chunk_bytes, max_chunks):
    """Split [0, n_rows) into a small number of large row chunks whose starts
    are aligned to the dtype's HBM sublane tiling (8 f32 / 16 bf16 / 32 i8)."""
    sublane = max(8, 32 // itemsize)
    total_bytes = n_rows * row_bytes
    want = min(
        max_chunks,
        max(1, total_bytes // max(1, target_chunk_bytes)),
        max(1, n_rows // sublane),
    )
    if want <= 1:
        return [(0, n_rows)]
    rows_per = -(-n_rows // want)                                   # ceil
    rows_per = ((rows_per + sublane - 1) // sublane) * sublane      # align up
    chunks = []
    start = 0
    while start < n_rows:
        size = min(rows_per, n_rows - start)
        chunks.append((start, size))
        start += size
    return chunks


def _make_flatten_dma_kernel(chunks):
    """Kernel: copy each (static) row chunk HBM->HBM with an async DMA."""

    def kernel(x_hbm, o_hbm, sems):
        copies = []
        for i, (start, size) in enumerate(chunks):
            cp = pltpu.make_async_copy(
                x_hbm.at[pl.ds(start, size)],
                o_hbm.at[pl.ds(start, size)],
                sems.at[i],
            )
            cp.start()
            copies.append(cp)
        for cp in copies:
            cp.wait()

    return kernel


def flatten(x, *, target_chunk_bytes=8 * 1024 * 1024, max_chunks=8):
    """Equivalent of torch Flatten.forward: (N, ...) -> (N, prod(...))."""
    n = x.shape[0]
    f = math.prod(x.shape[1:])          # math.prod(()) == 1 for 1-D inputs
    total = n * f

    # Degenerate inputs: nothing to copy, metadata-only reshape is exact.
    if total == 0:
        return jnp.reshape(x, (n, f))

    # Glue: row-major reshape to the final (N, F) shape (same element order as
    # torch .view).  The kernel then materializes it with a pure HBM->HBM copy.
    # TODO(synk): when the caller donates x, this reshape alone is the answer
    # and the copy kernel could be skipped entirely.
    x2 = jnp.reshape(x, (n, f))

    itemsize = jnp.dtype(x.dtype).itemsize
    chunks = _row_chunks(
        n, f * itemsize, itemsize,
        target_chunk_bytes=target_chunk_bytes, max_chunks=max_chunks,
    )

    return pl.pallas_call(
        _make_flatten_dma_kernel(chunks),
        out_shape=jax.ShapeDtypeStruct((n, f), x.dtype),
        in_specs=[pl.BlockSpec(memory_space=pl.ANY)],
        out_specs=pl.BlockSpec(memory_space=pl.ANY),
        scratch_shapes=[pltpu.SemaphoreType.DMA((len(chunks),))],
    )(x2)


if __name__ == "__main__":
    key = jax.random.PRNGKey(0)

    # Small NCHW input consistent with a conv-style feature map.
    x = jax.random.normal(key, (2, 4, 16, 16), dtype=jnp.float32)
    ref = jnp.reshape(x, (x.shape[0], -1))   # == torch x.view(N, -1)

    y = jax.block_until_ready(flatten(x))
    assert y.shape == (2, 4 * 16 * 16), y.shape
    assert y.dtype == x.dtype
    assert jnp.array_equal(y, ref), "flatten kernel mismatch"

    # Exercise the multi-chunk DMA path with a slightly larger batch and a
    # small chunk-size target (still tiny: ~1 MiB total).
    x_big = jax.random.normal(key, (64, 4, 16, 16), dtype=jnp.float32)
    ref_big = jnp.reshape(x_big, (x_big.shape[0], -1))
    y_big = jax.block_until_ready(
        flatten(x_big, target_chunk_bytes=64 * 1024, max_chunks=8))
    assert y_big.shape == (64, 4 * 16 * 16), y_big.shape
    assert jnp.array_equal(y_big, ref_big), "flatten kernel (chunked) mismatch"

    print("KERNEL_OK")
</pallas_src>

<mosaic_0001>
module attributes {stable_mosaic.version = 11 : i64} {
  func.func @kernel(%arg0: memref<2x1024xf32, #tpu.memory_space<any>>, %arg1: memref<2x1024xf32, #tpu.memory_space<any>>, %arg2: memref<1x!tpu.dma_semaphore, #tpu.memory_space<semaphore_mem>>) attributes {dimension_semantics = [], scalar_prefetch = 0 : i64, scratch_operands = 1 : i64, tpu.core_type = #tpu.core_type<tc>} {
    %c0_i32 = arith.constant 0 : i32
    %c0_i32_0 = arith.constant 0 : i32
    %c0_i32_1 = arith.constant 0 : i32
    %0 = tpu.memref_slice %arg0[%c0_i32_0, %c0_i32_1] : memref<2x1024xf32, #tpu.memory_space<any>> -> memref<2x1024xf32, #tpu.memory_space<any>>
    %c0_i32_2 = arith.constant 0 : i32
    %c0_i32_3 = arith.constant 0 : i32
    %1 = tpu.memref_slice %arg1[%c0_i32_2, %c0_i32_3] : memref<2x1024xf32, #tpu.memory_space<any>> -> memref<2x1024xf32, #tpu.memory_space<any>>
    %2 = tpu.memref_slice %arg2[%c0_i32] : memref<1x!tpu.dma_semaphore, #tpu.memory_space<semaphore_mem>> -> memref<1x!tpu.dma_semaphore, #tpu.memory_space<semaphore_mem>>
    %3 = tpu.memref_squeeze %2 : memref<1x!tpu.dma_semaphore, #tpu.memory_space<semaphore_mem>> -> memref<!tpu.dma_semaphore, #tpu.memory_space<semaphore_mem>>
    tpu.enqueue_dma source(%0 : memref<2x1024xf32, #tpu.memory_space<any>>) target(%1 : memref<2x1024xf32, #tpu.memory_space<any>>) target_semaphore(%3 : memref<!tpu.dma_semaphore, #tpu.memory_space<semaphore_mem>>)
    %c0_i32_4 = arith.constant 0 : i32
    %c0_i32_5 = arith.constant 0 : i32
    %c0_i32_6 = arith.constant 0 : i32
    %4 = tpu.memref_slice %arg0[%c0_i32_5, %c0_i32_6] : memref<2x1024xf32, #tpu.memory_space<any>> -> memref<2x1024xf32, #tpu.memory_space<any>>
    %c0_i32_7 = arith.constant 0 : i32
    %c0_i32_8 = arith.constant 0 : i32
    %5 = tpu.memref_slice %arg1[%c0_i32_7, %c0_i32_8] : memref<2x1024xf32, #tpu.memory_space<any>> -> memref<2x1024xf32, #tpu.memory_space<any>>
    %6 = tpu.memref_slice %arg2[%c0_i32_4] : memref<1x!tpu.dma_semaphore, #tpu.memory_space<semaphore_mem>> -> memref<1x!tpu.dma_semaphore, #tpu.memory_space<semaphore_mem>>
    %7 = tpu.memref_squeeze %6 : memref<1x!tpu.dma_semaphore, #tpu.memory_space<semaphore_mem>> -> memref<!tpu.dma_semaphore, #tpu.memory_space<semaphore_mem>>
    tpu.wait_dma2 semaphore(%7 : memref<!tpu.dma_semaphore, #tpu.memory_space<semaphore_mem>>) src(%4 : memref<2x1024xf32, #tpu.memory_space<any>>) dst(%5 : memref<2x1024xf32, #tpu.memory_space<any>>)
    return
  }
}

</mosaic_0001>

<llo_original>
// kernel: tpu_custom_call.1
$region0: #{tpu_custom_call.1}
  #allocation0 [shape = 'u32[]', space=smem, size = 0x4, offset = 0x4, fixed_abs, tag = 'smem constant byte address 0x4 - core index']
  #allocation1 [shape = 'u32[144,128]{1,0:T(1,128)}', space=vmem, size = 0x12000, scoped, tag = 'internal scratch']
  #allocation2 [shape = 's32[1]{0}', space=sflag, size = 0x4, scoped, tag = 'scratch operand']
  #allocation3 [shape = 's32[]', space=sflag, size = 0x4, offset = 0, fixed_abs, tag = 'sflag constant byte address 0x0 - dummy sync flag']
  #allocation4 [shape = 'u32[0]{0}', space=smem, size = 0, offset = 0, fixed_abs, tag = 'smem constant byte address 0x0 - null']
  %s0 = inlined_call_operand.hbm [shape: f32[2,1024], index: 0, kind: input, shape index: {}]
  %s1 = inlined_call_operand.hbm [shape: f32[2,1024], index: 1, kind: output, shape index: {}]
  %s2 = sld [smem:[#allocation0]]
  $region2: #{tpu_custom_call.1} parent=0
    _
  %s4 = ssub.s32 1, %s2
  %s5 = scalar_select 0, %s4, %s2
  %s7 = sshll.u32 1, 14
  %s8 = sxor.u32 4294967295, %s7
  %s11 = sshll.u32 3, 24
  %s12 = sxor.u32 4294967295, %s11
  %s13 = sand.u32 0, %s12
  %s15 = sor.u32 %s13, 0
  %18 = dma.general %s0, 256, %s1, [#allocation2], [#allocation3], [#allocation4], %s15, 0
  %s19 = smul.u32 2, 1
  %s20 = smul.u32 %s19, 8
  %s21 = sshll.u32 %s20, 4
  %22 = dma.done [#allocation2], %s21
  %23 = vsyncmov [#allocation2]
  %s24 = vpop.sfrf %23
  %p25 = scmp.eq.s32.totalorder %s24, 0
  %p26 = pneg %p25
  %28 = shalt.err (%p26)

</llo_original>
